<compile_context>
chip_gen: v5e
topology: v5e:2x2
jax: 0.10.0
libtpu: 0.0.40
codegen_flags: <defaults>
</compile_context>

<pallas_src>
from functools import partial

import jax
import jax.numpy as jnp
from jax.experimental import pallas as pl
from jax.experimental.pallas import tpu as pltpu

_LANE = 128
_SUBLANE = 8
_TARGET_BLOCK_BYTES = 2 * 1024 * 1024    # per-block streaming budget (plateau, v7x-safe)
_MAX_TILE_ROWS = 8192
_VMEM_LIMIT_BYTES = 32 * 1024 * 1024     # > v5e 16 MiB default, == v6e/v7x defaults


def _layernorm_kernel(x_ref, w_ref, b_ref, o_ref, *, eps):
    """Standard path: block last dim == hidden (the normalized axis)."""
    x = x_ref[...].astype(jnp.float32)
    mean = jnp.mean(x, axis=-1, keepdims=True)
    d = x - mean                                    # centered once, reused
    var = jnp.mean(d * d, axis=-1, keepdims=True)
    y = d * jax.lax.rsqrt(var + eps)
    w = w_ref[...].astype(jnp.float32)
    b = b_ref[...].astype(jnp.float32)
    o_ref[...] = (y * w + b).astype(o_ref.dtype)


def _layernorm_packed_kernel(x_ref, w_ref, b_ref, avg_ref, o_ref, *, eps):
    """Lane-dense path: 128 // hidden rows are packed per 128-lane row.

    Per-row statistics are segmented reductions across the lane axis, implemented
    as matmuls with the (resident) block-diagonal averaging matrix so every
    intermediate and the output store stay full lane width.
    """
    x = x_ref[...].astype(jnp.float32)              # (tile_rows, 128)
    avg = avg_ref[...]                              # (128, 128) f32, constant block
    mean = jnp.dot(x, avg, preferred_element_type=jnp.float32)   # segment mean, broadcast
    d = x - mean                                    # centered once, reused
    var = jnp.dot(d * d, avg, preferred_element_type=jnp.float32)
    y = d * jax.lax.rsqrt(var + eps)
    w = w_ref[...].astype(jnp.float32)
    b = b_ref[...].astype(jnp.float32)
    o_ref[...] = (y * w + b).astype(o_ref.dtype)


def _choose_tile_rows(work_rows, width, itemsize):
    """Row-tile from a VMEM byte budget; sublane-aligned for the dtype; small
    inputs get a single full-extent block (no per-step overhead fragmentation)."""
    sublane = _SUBLANE * max(1, 4 // max(1, int(itemsize)))   # 8 f32 / 16 bf16 / 32 int8
    tile = _TARGET_BLOCK_BYTES // max(1, width * int(itemsize))
    tile = min(tile, _MAX_TILE_ROWS)
    tile = max(sublane, (tile // sublane) * sublane)
    if tile >= work_rows:
        return work_rows          # full-extent block (allowed for any size)
    return tile


def _compiler_params():
    return pltpu.CompilerParams(
        dimension_semantics=("parallel",),
        vmem_limit_bytes=_VMEM_LIMIT_BYTES,
    )


def _ln2d_unpacked(x2d, weight, bias, eps):
    rows, hidden = x2d.shape
    w2d = weight.reshape(1, hidden)
    b2d = bias.reshape(1, hidden)
    tile_rows = _choose_tile_rows(rows, hidden, x2d.dtype.itemsize)
    grid = (pl.cdiv(rows, tile_rows),)
    return pl.pallas_call(
        partial(_layernorm_kernel, eps=eps),
        out_shape=jax.ShapeDtypeStruct((rows, hidden), x2d.dtype),
        grid_spec=pltpu.PrefetchScalarGridSpec(
            num_scalar_prefetch=0,
            grid=grid,
            in_specs=[
                pl.BlockSpec((tile_rows, hidden), lambda i: (i, 0)),
                pl.BlockSpec((1, hidden), lambda i: (0, 0)),
                pl.BlockSpec((1, hidden), lambda i: (0, 0)),
            ],
            out_specs=pl.BlockSpec((tile_rows, hidden), lambda i: (i, 0)),
        ),
        compiler_params=_compiler_params(),
    )(x2d, w2d, b2d)


def _ln2d_packed(x2d, weight, bias, eps, hidden, pack):
    rows, _ = x2d.shape                         # precondition: rows % pack == 0
    work_rows = rows // pack
    width = _LANE
    xp = x2d.reshape(work_rows, width)          # zero-copy (row-major contiguous)
    w2d = jnp.tile(weight, pack).reshape(1, width)
    b2d = jnp.tile(bias, pack).reshape(1, width)

    # Block-diagonal averaging matrix, built once on the host side of the call.
    seg = jnp.arange(width, dtype=jnp.int32) // hidden
    avg = jnp.where(seg[:, None] == seg[None, :], 1.0 / hidden, 0.0).astype(jnp.float32)

    tile_rows = _choose_tile_rows(work_rows, width, x2d.dtype.itemsize)
    grid = (pl.cdiv(work_rows, tile_rows),)
    out = pl.pallas_call(
        partial(_layernorm_packed_kernel, eps=eps),
        out_shape=jax.ShapeDtypeStruct((work_rows, width), x2d.dtype),
        grid_spec=pltpu.PrefetchScalarGridSpec(
            num_scalar_prefetch=0,
            grid=grid,
            in_specs=[
                pl.BlockSpec((tile_rows, width), lambda i: (i, 0)),
                pl.BlockSpec((1, width), lambda i: (0, 0)),
                pl.BlockSpec((1, width), lambda i: (0, 0)),
                # Constant block index -> stays resident in VMEM across grid steps.
                pl.BlockSpec((width, width), lambda i: (0, 0)),
            ],
            out_specs=pl.BlockSpec((tile_rows, width), lambda i: (i, 0)),
        ),
        compiler_params=_compiler_params(),
    )(xp, w2d, b2d, avg)
    return out.reshape(rows, hidden)


def optimized_layer_norm(x, weight, bias, eps=1e-5):
    """LayerNorm over the last axis of x, computed in a Pallas TPU kernel.

    x: array of shape (..., hidden); weight/bias: shape (hidden,).
    """
    orig_shape = x.shape
    hidden = int(orig_shape[-1])
    rows = 1
    for d in orig_shape[:-1]:
        rows *= int(d)

    x2d = x.reshape(rows, hidden)
    weight = weight.reshape(-1)
    bias = bias.reshape(-1)

    # Lane-dense packing for small hidden (e.g. 32): pack 128//hidden rows per
    # 128-lane vector so loads/stores are full-width instead of masked.
    pack = _LANE // hidden if (0 < hidden < _LANE and _LANE % hidden == 0) else 1

    if pack > 1 and rows >= pack:
        rem = rows % pack
        main = rows - rem
        if rem == 0:
            out2d = _ln2d_packed(x2d, weight, bias, eps, hidden, pack)
        else:
            # Ragged remainder: packed main body (zero-copy reshape) + a tiny
            # unpacked call on the leftover rows. No full-tensor pad/slice.
            out_main = _ln2d_packed(x2d[:main], weight, bias, eps, hidden, pack)
            out_tail = _ln2d_unpacked(x2d[main:], weight, bias, eps)
            out2d = jnp.concatenate([out_main, out_tail], axis=0)
    else:
        out2d = _ln2d_unpacked(x2d, weight, bias, eps)

    return out2d.reshape(orig_shape)


def _layer_norm_ref(x, weight, bias, eps):
    # Pure-JAX reference mirroring the module's TPU branch.
    mean = jnp.mean(x, axis=-1, keepdims=True)
    var = jnp.var(x, axis=-1, keepdims=True)
    return weight * ((x - mean) / jnp.sqrt(var + eps)) + bias


if __name__ == "__main__":
    eps = 1e-5
    # Tolerance: segmented stats go through f32 MXU matmuls (multi-pass bf16);
    # 5e-4 is far below any semantic-bug scale for unit-normalized outputs.
    tol = 5e-4
    key = jax.random.PRNGKey(0)
    k0, k1, k2, k3 = jax.random.split(key, 4)

    # Primary config matching the module: normalized_shape = hidden = 32,
    # parameters exactly as in __init__ (ones / zeros).
    batch, seq, hidden = 2, 8, 32
    x = jax.random.normal(k0, (batch, seq, hidden), dtype=jnp.float32)
    weight = jnp.ones((hidden,), dtype=jnp.float32)
    bias = jnp.zeros((hidden,), dtype=jnp.float32)

    out = jax.block_until_ready(optimized_layer_norm(x, weight, bias, eps=eps))
    ref = _layer_norm_ref(x, weight, bias, eps)
    assert out.shape == x.shape
    assert float(jnp.max(jnp.abs(out - ref))) < tol, "mismatch vs reference (primary)"

    # Non-trivial affine params on the packed (divisible) path.
    x_b = jax.random.normal(k1, (4, 40, 32), dtype=jnp.float32)
    w_b = jax.random.normal(k2, (32,), dtype=jnp.float32)
    b_b = jax.random.normal(k3, (32,), dtype=jnp.float32)
    out_b = jax.block_until_ready(optimized_layer_norm(x_b, w_b, b_b, eps=eps))
    ref_b = _layer_norm_ref(x_b, w_b, b_b, eps)
    assert float(jnp.max(jnp.abs(out_b - ref_b))) < tol, "mismatch (packed path)"

    # Ragged row count (rows % pack != 0): packed main + tiny unpacked tail.
    x_r = jax.random.normal(k1, (3, 7, 32), dtype=jnp.float32)
    out_r = jax.block_until_ready(optimized_layer_norm(x_r, w_b, b_b, eps=eps))
    ref_r = _layer_norm_ref(x_r, w_b, b_b, eps)
    assert float(jnp.max(jnp.abs(out_r - ref_r))) < tol, "mismatch (ragged remainder)"

    # Standard path (hidden is a multiple of 128).
    x_c = jax.random.normal(k1, (2, 16, 128), dtype=jnp.float32)
    w_c = jnp.ones((128,), dtype=jnp.float32)
    b_c = jnp.zeros((128,), dtype=jnp.float32)
    out_c = jax.block_until_ready(optimized_layer_norm(x_c, w_c, b_c, eps=eps))
    ref_c = _layer_norm_ref(x_c, w_c, b_c, eps)
    assert float(jnp.max(jnp.abs(out_c - ref_c))) < tol, "mismatch (standard path)"

    print("KERNEL_OK")
</pallas_src>

<mosaic_0001>
module attributes {stable_mosaic.version = 11 : i64} {
  func.func @_layernorm_packed_kernel(%arg0: i32, %arg1: memref<4x128xf32, #tpu.memory_space<vmem>>, %arg2: memref<1x128xf32, #tpu.memory_space<vmem>>, %arg3: memref<1x128xf32, #tpu.memory_space<vmem>>, %arg4: memref<128x128xf32, #tpu.memory_space<vmem>>, %arg5: memref<4x128xf32, #tpu.memory_space<vmem>>) attributes {dimension_semantics = [#tpu.dimension_semantics<parallel>], iteration_bounds = array<i64: 1>, scalar_prefetch = 0 : i64, scratch_operands = 0 : i64, tpu.core_type = #tpu.core_type<tc>, window_params = [{transform_indices = @transform_0, window_bounds = array<i64: 4, 128>}, {pipeline_mode = #tpu.pipeline_mode<synchronous>, transform_indices = @transform_1, window_bounds = array<i64: 1, 128>}, {pipeline_mode = #tpu.pipeline_mode<synchronous>, transform_indices = @transform_2, window_bounds = array<i64: 1, 128>}, {pipeline_mode = #tpu.pipeline_mode<synchronous>, transform_indices = @transform_3, window_bounds = array<i64: 128, 128>}, {transform_indices = @transform_4, window_bounds = array<i64: 4, 128>}]} {
    %c0 = arith.constant 0 : index
    %c0_0 = arith.constant 0 : index
    %0 = vector.load %arg1[%c0, %c0_0] : memref<4x128xf32, #tpu.memory_space<vmem>>, vector<4x128xf32>
    %c0_1 = arith.constant 0 : index
    %c0_2 = arith.constant 0 : index
    %1 = vector.load %arg4[%c0_1, %c0_2] : memref<128x128xf32, #tpu.memory_space<vmem>>, vector<128x128xf32>
    %cst = arith.constant dense<0.000000e+00> : vector<4x128xf32>
    %2 = tpu.matmul %0, %1, %cst {dimension_numbers = #tpu.dot_dimension_numbers<[1], [0], [0], [1], [0, 0, 1, 1], [], []>} : vector<4x128xf32>, vector<128x128xf32>, vector<4x128xf32> -> vector<4x128xf32>
    %3 = arith.subf %0, %2 : vector<4x128xf32>
    %4 = arith.mulf %3, %3 : vector<4x128xf32>
    %cst_3 = arith.constant dense<0.000000e+00> : vector<4x128xf32>
    %5 = tpu.matmul %4, %1, %cst_3 {dimension_numbers = #tpu.dot_dimension_numbers<[1], [0], [0], [1], [0, 0, 1, 1], [], []>} : vector<4x128xf32>, vector<128x128xf32>, vector<4x128xf32> -> vector<4x128xf32>
    %cst_4 = arith.constant 9.99999974E-6 : f32
    %6 = vector.broadcast %cst_4 : f32 to vector<4x128xf32>
    %7 = arith.addf %5, %6 : vector<4x128xf32>
    %8 = math.rsqrt %7 : vector<4x128xf32>
    %9 = arith.mulf %3, %8 : vector<4x128xf32>
    %c0_5 = arith.constant 0 : index
    %c0_6 = arith.constant 0 : index
    %10 = vector.load %arg2[%c0_5, %c0_6] : memref<1x128xf32, #tpu.memory_space<vmem>>, vector<1x128xf32>
    %c0_7 = arith.constant 0 : index
    %c0_8 = arith.constant 0 : index
    %11 = vector.load %arg3[%c0_7, %c0_8] : memref<1x128xf32, #tpu.memory_space<vmem>>, vector<1x128xf32>
    %12 = vector.broadcast %10 : vector<1x128xf32> to vector<4x128xf32>
    %13 = arith.mulf %9, %12 : vector<4x128xf32>
    %14 = vector.broadcast %11 : vector<1x128xf32> to vector<4x128xf32>
    %15 = arith.addf %13, %14 : vector<4x128xf32>
    %c0_9 = arith.constant 0 : index
    %c0_10 = arith.constant 0 : index
    %16 = vector.load %arg5[%c0_9, %c0_10] : memref<4x128xf32, #tpu.memory_space<vmem>>, vector<4x128xf32>
    tpu.vector_store %arg5[%c0_9, %c0_10], %15 {strides = array<i32>} : memref<4x128xf32, #tpu.memory_space<vmem>>, vector<4x128xf32>,
    return
  }
  func.func @transform_0(%arg0: i32) -> (i32, i32) {
    %c0_i32 = arith.constant 0 : i32
    %c0_i32_0 = arith.constant 0 : i32
    return %arg0, %c0_i32 : i32, i32
  }
  func.func @transform_1(%arg0: i32) -> (i32, i32) {
    %c0_i32 = arith.constant 0 : i32
    %c0_i32_0 = arith.constant 0 : i32
    %c0_i32_1 = arith.constant 0 : i32
    return %c0_i32, %c0_i32_0 : i32, i32
  }
  func.func @transform_2(%arg0: i32) -> (i32, i32) {
    %c0_i32 = arith.constant 0 : i32
    %c0_i32_0 = arith.constant 0 : i32
    %c0_i32_1 = arith.constant 0 : i32
    return %c0_i32, %c0_i32_0 : i32, i32
  }
  func.func @transform_3(%arg0: i32) -> (i32, i32) {
    %c0_i32 = arith.constant 0 : i32
    %c0_i32_0 = arith.constant 0 : i32
    %c0_i32_1 = arith.constant 0 : i32
    return %c0_i32, %c0_i32_0 : i32, i32
  }
  func.func @transform_4(%arg0: i32) -> (i32, i32) {
    %c0_i32 = arith.constant 0 : i32
    %c0_i32_0 = arith.constant 0 : i32
    return %arg0, %c0_i32 : i32, i32
  }
}

</mosaic_0001>

<llo_original>
// kernel: tpu_custom_call.1
$region0: #{tpu_custom_call.1}
  #allocation0 [shape = 'u32[]', space=smem, size = 0x4, offset = 0x4, fixed_abs, tag = 'smem constant byte address 0x4 - core index']
  #allocation1 [shape = 'u32[72,128]{1,0:T(1,128)}', space=vmem, size = 0x9000, scoped, tag = 'internal scratch']
  %s0 = inlined_call_operand.hbm [shape: f32[4,128], index: 0, kind: input, shape index: {}]
  %s1 = inlined_call_operand.hbm [shape: f32[1,128], index: 1, kind: input, shape index: {}]
  %s2 = inlined_call_operand.vmem [shape: f32[1,128], index: 2, kind: input, shape index: {}]
  %s3 = inlined_call_operand.hbm [shape: f32[128,128], index: 3, kind: input, shape index: {}]
  %s4 = inlined_call_operand.hbm [shape: f32[4,128], index: 4, kind: output, shape index: {}]
  %s5 = sld [smem:[#allocation0]]
  $region38: #{tpu_custom_call.1} parent=0
    _
  %s7 = ssub.s32 1, %s5
  %s8 = scalar_select 0, %s7, %s5
  $region1: #{tpu_custom_call.1} parent=0
    #allocation2 [shape = 'u8[2048]{0}', space=vmem, size = 0x800, scoped, tag = 'input window, operand 0, single buffered']
    #allocation3 [shape = 's32[1]{0}', space=sflag, size = 0x4, scoped, tag = 'scoped memory for tpu_custom_call.1']
    #allocation4 [shape = 's32[1]{0}', space=sflag, size = 0x4, scoped, tag = 'scoped memory for tpu_custom_call.1']
    #allocation5 [shape = 'u8[512]{0}', space=vmem, size = 0x400, scoped, tag = 'input window, operand 1, single buffered']
    #allocation6 [shape = 's32[1]{0}', space=sflag, size = 0x4, scoped, tag = 'scoped memory for tpu_custom_call.1']
    #allocation7 [shape = 'u8[65536]{0}', space=vmem, size = 0x10000, scoped, tag = 'input window, operand 3, single buffered']
    #allocation8 [shape = 'u8[2048]{0}', space=vmem, size = 0x800, scoped, tag = 'output window, operand 0, single buffered']
    %9 = vsyncpa [#allocation3], 0
    %10 = vsyncpa [#allocation6], 0
    %11 = vsyncpa [#allocation4], 0
    // Predicated region
    $region2: #{tpu_custom_call.1} parent=1 // pred_check
      _
    $region3: #{tpu_custom_call.1} parent=1 // pred_check_branch
      %13 = sbr.rel (0) target = $region5
    $region4: #{tpu_custom_call.1} parent=1 // pred_region
      %15 = vsyncadd [#allocation3], 0
      %s17 = sshll.u32 %s0, 4
      %s18 = int_to_ptr.hbm [resolvable:$true] %s17
      %s19 = sshll.u32 [#allocation2], 4
      %s20 = int_to_ptr.vmem [resolvable:$true] %s19
      %22 = dma.hbm_to_vmem [thread:$0]  %s18, 64, %s20, [#allocation3]
    $region5: #{tpu_custom_call.1} parent=1 // pred_fallthru
      _
    // Predicated region
    $region6: #{tpu_custom_call.1} parent=1 // pred_check
      _
    $region7: #{tpu_custom_call.1} parent=1 // pred_check_branch
      %24 = sbr.rel (0) target = $region9
    $region8: #{tpu_custom_call.1} parent=1 // pred_region
      %26 = vsyncadd [#allocation6], 0
      %s28 = sshll.u32 %s1, 4
      %s29 = int_to_ptr.hbm [resolvable:$true] %s28
      %s30 = sshll.u32 [#allocation5], 4
      %s31 = int_to_ptr.vmem [resolvable:$true] %s30
      %33 = dma.hbm_to_vmem [thread:$0]  %s29, 16, %s31, [#allocation6]
    $region9: #{tpu_custom_call.1} parent=1 // pred_fallthru
      _
    // Predicated region
    $region10: #{tpu_custom_call.1} parent=1 // pred_check
      _
    $region11: #{tpu_custom_call.1} parent=1 // pred_check_branch
      %35 = sbr.rel (0) target = $region13
    $region12: #{tpu_custom_call.1} parent=1 // pred_region
      _
    $region13: #{tpu_custom_call.1} parent=1 // pred_fallthru
      _
    // Predicated region
    $region14: #{tpu_custom_call.1} parent=1 // pred_check
      _
    $region15: #{tpu_custom_call.1} parent=1 // pred_check_branch
      %37 = sbr.rel (0) target = $region17
    $region16: #{tpu_custom_call.1} parent=1 // pred_region
      %39 = vsyncadd [#allocation6], 0
      %s40 = sshll.u32 %s3, 4
      %s41 = int_to_ptr.hbm [resolvable:$true] %s40
      %s42 = sshll.u32 [#allocation7], 4
      %s43 = int_to_ptr.vmem [resolvable:$true] %s42
      %48 = dma.hbm_to_vmem [thread:$0]  %s41, 2048, %s43, [#allocation6], 128, 128, 8
    $region17: #{tpu_custom_call.1} parent=1 // pred_fallthru
      _
    // Predicated region
    $region18: #{tpu_custom_call.1} parent=1 // pred_check
      _
    $region19: #{tpu_custom_call.1} parent=1 // pred_check_branch
      %50 = sbr.rel (0) target = $region21
    $region20: #{tpu_custom_call.1} parent=1 // pred_region
      %52 = dma.done [#allocation3], 64
    $region21: #{tpu_custom_call.1} parent=1 // pred_fallthru
      _
    // Predicated region
    $region22: #{tpu_custom_call.1} parent=1 // pred_check
      _
    $region23: #{tpu_custom_call.1} parent=1 // pred_check_branch
      %54 = sbr.rel (0) target = $region25
    $region24: #{tpu_custom_call.1} parent=1 // pred_region
      %56 = dma.done [#allocation6], 16
    $region25: #{tpu_custom_call.1} parent=1 // pred_fallthru
      _
    // Predicated region
    $region26: #{tpu_custom_call.1} parent=1 // pred_check
      _
    $region27: #{tpu_custom_call.1} parent=1 // pred_check_branch
      %58 = sbr.rel (0) target = $region29
    $region28: #{tpu_custom_call.1} parent=1 // pred_region
      %60 = dma.done [#allocation6], 2048
    $region29: #{tpu_custom_call.1} parent=1 // pred_fallthru
      _
    %v61 = vld [vmem:[#allocation2] sm:$0xf]
    %v62 = vld [vmem:[#allocation7] sm:$0xff]
    %v63 = vld [vmem:[#allocation7 + $0x8] sm:$0xff]
    %v64 = vld [vmem:[#allocation7 + $0x10] sm:$0xff]
    %v65 = vld [vmem:[#allocation7 + $0x18] sm:$0xff]
    %v66 = vld [vmem:[#allocation7 + $0x20] sm:$0xff]
    %v67 = vld [vmem:[#allocation7 + $0x28] sm:$0xff]
    %v68 = vld [vmem:[#allocation7 + $0x30] sm:$0xff]
    %v69 = vld [vmem:[#allocation7 + $0x38] sm:$0xff]
    %v70 = vld [vmem:[#allocation7 + $0x40] sm:$0xff]
    %v71 = vld [vmem:[#allocation7 + $0x48] sm:$0xff]
    %v72 = vld [vmem:[#allocation7 + $0x50] sm:$0xff]
    %v73 = vld [vmem:[#allocation7 + $0x58] sm:$0xff]
    %v74 = vld [vmem:[#allocation7 + $0x60] sm:$0xff]
    %v75 = vld [vmem:[#allocation7 + $0x68] sm:$0xff]
    %v76 = vld [vmem:[#allocation7 + $0x70] sm:$0xff]
    %v77 = vld [vmem:[#allocation7 + $0x78] sm:$0xff]
    %78 = vmatpush.msra.mxu0 %v77
    %79 = vmatpush.msra.mxu0 %v76
    %80 = vmatpush.msra.mxu0 %v75
    %81 = vmatpush.msra.mxu0 %v74
    %82 = vmatpush.msra.mxu0 %v73
    %83 = vmatpush.msra.mxu0 %v72
    %84 = vmatpush.msra.mxu0 %v71
    %85 = vmatpush.msra.mxu0 %v70
    %86 = vmatpush.msra.mxu0 %v69
    %87 = vmatpush.msra.mxu0 %v68
    %88 = vmatpush.msra.mxu0 %v67
    %89 = vmatpush.msra.mxu0 %v66
    %90 = vmatpush.msra.mxu0 %v65
    %91 = vmatpush.msra.mxu0 %v64
    %92 = vmatpush.msra.mxu0 %v63
    %93 = vmatpush.msra.mxu0 %v62
    %94 = vmatmul.f32.gmra.mxu0 %v61
    %v95 = vpop.f32.mrf.mxu0
    %v96 = vadd.f32 0.0, %v95
    %97 = vdwg.mxu0
    %v98 = vsub.f32 %v61, %v96
    %v99 = vmul.f32 %v98, %v98
    %100 = vmatpush.msra.mxu0 %v77
    %101 = vmatpush.msra.mxu0 %v76
    %102 = vmatpush.msra.mxu0 %v75
    %103 = vmatpush.msra.mxu0 %v74
    %104 = vmatpush.msra.mxu0 %v73
    %105 = vmatpush.msra.mxu0 %v72
    %106 = vmatpush.msra.mxu0 %v71
    %107 = vmatpush.msra.mxu0 %v70
    %108 = vmatpush.msra.mxu0 %v69
    %109 = vmatpush.msra.mxu0 %v68
    %110 = vmatpush.msra.mxu0 %v67
    %111 = vmatpush.msra.mxu0 %v66
    %112 = vmatpush.msra.mxu0 %v65
    %113 = vmatpush.msra.mxu0 %v64
    %114 = vmatpush.msra.mxu0 %v63
    %115 = vmatpush.msra.mxu0 %v62
    %116 = vmatmul.f32.gmra.mxu0 %v99
    %v117 = vpop.f32.mrf.mxu0
    %v118 = vadd.f32 1e-05, %v117
    %119 = vdwg.mxu0
    %v120 = vrsqrt.pop %v118
    %v121 = vmul.f32 %v120, %v118
    %v122 = vmul.f32 %v121, %v120
    %v123 = vmul.f32 0.5, %v122
    %v124 = vsub.f32 1.5, %v123
    %v125 = vmul.f32 %v120, %v124
    %vm126 = vweird.f32 %v118
    %vm127 = vweird.f32 %v120
    %vm128 = vmor %vm126, %vm127
    %v129 = vsel %vm128, %v120, %v125
    %v130 = vmul.f32 %v98, %v129
    %v131 = vld [vmem:[#allocation5] sm:$0x1]
    %v132 = vld [vmem:[%s2] sm:$0x1]
    %v134 = vperm.slane %v131, 0
    %v136 = vmul.f32 %v130, %v134
    %v138 = vperm.slane %v132, 0
    %v140 = vadd.f32 %v136, %v138
    %141 = vst [vmem:[#allocation8] sm:$0xf] %v140
    // Predicated region
    $region30: #{tpu_custom_call.1} parent=1 // pred_check
      _
    $region31: #{tpu_custom_call.1} parent=1 // pred_check_branch
      %143 = sbr.rel (0) target = $region33
    $region32: #{tpu_custom_call.1} parent=1 // pred_region
      %145 = vsyncadd [#allocation4], 0
      %s147 = sshll.u32 [#allocation8], 4
      %s148 = int_to_ptr.vmem [resolvable:$true] %s147
      %s149 = sshll.u32 %s4, 4
      %s150 = int_to_ptr.hbm [resolvable:$true] %s149
      %152 = dma.vmem_to_hbm [thread:$0]  %s148, 64, %s150, [#allocation4]
    $region33: #{tpu_custom_call.1} parent=1 // pred_fallthru
      _
    // Predicated region
    $region34: #{tpu_custom_call.1} parent=1 // pred_check
      _
    $region35: #{tpu_custom_call.1} parent=1 // pred_check_branch
      %154 = sbr.rel (0) target = $region37
    $region36: #{tpu_custom_call.1} parent=1 // pred_region
      %156 = dma.done [#allocation4], 64
    $region37: #{tpu_custom_call.1} parent=1 // pred_fallthru
      _
    %157 = vsyncpa [#allocation3], 1
    %158 = vsyncpa [#allocation6], 1
    %159 = vsyncpa [#allocation4], 1

</llo_original>
